<compile_context>
chip_gen: v6e
topology: v6e:2x2x1
jax: 0.10.0
libtpu: 0.0.40
codegen_flags: <defaults>
</compile_context>

<pallas_src>
import functools
import math

import jax
import jax.numpy as jnp
from jax import lax
from jax.experimental import pallas as pl
from jax.experimental.pallas import tpu as pltpu

NUM_GROUPS = 32
EPS = 1e-5


# ----------------------------------------------------------------------------
# Kernel A: GroupNorm affine (precomputed scale/shift) + fused QKV projection
# ----------------------------------------------------------------------------
def _norm_qkv_kernel(x_ref, scale_ref, shift_ref, w_ref, b_ref,
                     q_ref, k_ref, v_ref, *, c):
    # x_ref: (1, tm, C) f32, scale/shift: (1, 1, C) f32,
    # w_ref: (C, 3C) bf16 (sm_scale pre-folded into the q third),
    # b_ref: (1, 3C) f32, outputs: (1, tm, C) bf16 each.
    xn = x_ref[0] * scale_ref[0] + shift_ref[0]                    # (tm, C) f32
    xnb = xn.astype(jnp.bfloat16)
    qkv = jnp.dot(xnb, w_ref[...],
                  preferred_element_type=jnp.float32) + b_ref[...]  # (tm, 3C) f32
    q_ref[0] = qkv[:, :c].astype(jnp.bfloat16)
    k_ref[0] = qkv[:, c:2 * c].astype(jnp.bfloat16)
    v_ref[0] = qkv[:, 2 * c:].astype(jnp.bfloat16)


# ----------------------------------------------------------------------------
# Kernel B: KV-resident flash attention + output projection + residual
# ----------------------------------------------------------------------------
def _flash_attn_out_kernel(q_ref, k_ref, v_ref, res_ref, woT_ref, bo_ref,
                           o_ref, *, tk):
    # q_ref: (1, tq, C) bf16            (per query tile)
    # k_ref, v_ref: (1, L, C) bf16      (VMEM-resident for the whole batch elem)
    # res_ref: (1, C, tq) f32           (residual, channel-major / NCHW layout)
    # woT_ref: (C_out, C_in) bf16 (= wo.T), bo_ref: (C, 1) f32
    # o_ref: (1, C, tq) f32             (channel-major output)
    q = q_ref[0]                                                   # (tq, C) bf16
    tq, c = q.shape
    L = k_ref.shape[1]
    nk = L // tk

    m0 = jnp.full((tq, 1), -jnp.inf, jnp.float32)
    l0 = jnp.zeros((tq, 1), jnp.float32)
    a0 = jnp.zeros((tq, c), jnp.float32)

    def body(j, carry):
        m_prev, l_prev, acc = carry
        start = pl.multiple_of(j * tk, tk)
        k = k_ref[0, pl.ds(start, tk), :]                          # (tk, C) bf16
        v = v_ref[0, pl.ds(start, tk), :]                          # (tk, C) bf16
        # scores[l, m] = q[l] . k[m]  (scale already folded into q's weights)
        s = lax.dot_general(q, k, (((1,), (1,)), ((), ())),
                            preferred_element_type=jnp.float32)    # (tq, tk)
        m_new = jnp.maximum(m_prev, jnp.max(s, axis=-1, keepdims=True))
        alpha = jnp.exp(m_prev - m_new)
        p = jnp.exp(s - m_new)
        l_new = alpha * l_prev + jnp.sum(p, axis=-1, keepdims=True)
        acc_new = alpha * acc + jnp.dot(p.astype(jnp.bfloat16), v,
                                        preferred_element_type=jnp.float32)
        return m_new, l_new, acc_new

    _, l_f, acc_f = lax.fori_loop(0, nk, body, (m0, l0, a0))

    attn = (acc_f * pl.reciprocal(l_f, approx=True)).astype(jnp.bfloat16)  # (tq, C)
    # out^T[c_out, l] = sum_ci wo[ci, c_out] * attn[l, ci]  (rhs-transposed dot)
    out_t = lax.dot_general(woT_ref[...], attn, (((1,), (1,)), ((), ())),
                            preferred_element_type=jnp.float32)    # (C, tq) f32
    o_ref[0] = out_t + bo_ref[...] + res_ref[0]


def _choose_tile(length, preferred):
    for t in preferred:
        if t <= length and length % t == 0:
            return t
    return length


def _vmem_limit(nbytes):
    # TODO(synk): cap is chosen for v7x (64 MiB physical VMEM per TC); v5e/v6e
    #             could go higher for very large L*C.
    return int(min(max(nbytes, 32 << 20), 64 << 20))


def vae_attention_block(x_nchw, params, *, tm=None, tq=None, tk=None):
    """x_nchw: (N, C, H, W) float32. Returns (N, C, H, W) float32."""
    n, c, h, w = x_nchw.shape
    assert c % NUM_GROUPS == 0, "channels must be divisible by 32 (GroupNorm)"
    L = h * w

    # ---------------- GroupNorm statistics (plain XLA, one mem-bound pass) ---
    x32 = x_nchw.astype(jnp.float32)
    xg = x32.reshape(n, NUM_GROUPS, (c // NUM_GROUPS) * h * w)
    mean_g = jnp.mean(xg, axis=-1)                                # (n, G)
    var_g = jnp.maximum(jnp.var(xg, axis=-1), 0.0)                # (n, G)
    inv_g = lax.rsqrt(var_g + jnp.float32(EPS))
    rep = c // NUM_GROUPS
    mean_c = jnp.repeat(mean_g, rep, axis=-1)                     # (n, c)
    inv_c = jnp.repeat(inv_g, rep, axis=-1)                       # (n, c)
    gamma = params["gamma"].astype(jnp.float32)
    beta = params["beta"].astype(jnp.float32)
    scale = (inv_c * gamma[None, :]).reshape(n, 1, c)
    shift = (beta[None, :] - mean_c * inv_c * gamma[None, :]).reshape(n, 1, c)

    # ---------------- weight prep: fold sm_scale, fuse QKV, transpose wo -----
    sm_scale = 1.0 / math.sqrt(c)
    w_qkv = jnp.concatenate(
        [params["wq"].astype(jnp.float32) * sm_scale,
         params["wk"].astype(jnp.float32),
         params["wv"].astype(jnp.float32)], axis=1).astype(jnp.bfloat16)  # (c, 3c)
    b_qkv = jnp.concatenate(
        [params["bq"].astype(jnp.float32) * sm_scale,
         params["bk"].astype(jnp.float32),
         params["bv"].astype(jnp.float32)]).reshape(1, 3 * c)
    woT = params["wo"].T.astype(jnp.bfloat16)                     # (c_out, c_in)
    bo_col = params["bo"].reshape(c, 1).astype(jnp.float32)

    x_seq = jnp.transpose(x32.reshape(n, c, L), (0, 2, 1))        # (n, L, c) f32
    x_res = x32.reshape(n, c, L)                                  # channel-major

    # ---------------- Kernel A: norm affine + fused QKV projection -----------
    tm = tm or _choose_tile(L, (1024, 512, 256, 128, 64, 32, 16))
    assert L % tm == 0

    x_blk = pl.BlockSpec((1, tm, c), lambda b, i: (b, i, 0))
    vec_blk = pl.BlockSpec((1, 1, c), lambda b, i: (b, 0, 0))
    w_blk = pl.BlockSpec((c, 3 * c), lambda b, i: (0, 0))
    bqkv_blk = pl.BlockSpec((1, 3 * c), lambda b, i: (0, 0))
    qkv_out_blk = pl.BlockSpec((1, tm, c), lambda b, i: (b, i, 0))

    qkv_cost = pl.CostEstimate(
        flops=6 * n * L * c * c,
        transcendentals=0,
        bytes_accessed=(n * L * c * 4            # x read
                        + 3 * c * c * 2          # fused weight
                        + 3 * n * L * c * 2      # q,k,v written
                        + 2 * n * c * 4),        # scale/shift
    )
    vmem_a = (2 * tm * c * 4 + 2 * c * 3 * c * 2 + 2 * 3 * c * 4
              + 2 * 3 * tm * c * 2 + 4 * c * 4) + (4 << 20)

    q, k, v = pl.pallas_call(
        functools.partial(_norm_qkv_kernel, c=c),
        out_shape=(jax.ShapeDtypeStruct((n, L, c), jnp.bfloat16),) * 3,
        grid_spec=pltpu.PrefetchScalarGridSpec(
            num_scalar_prefetch=0,
            grid=(n, L // tm),
            in_specs=[x_blk, vec_blk, vec_blk, w_blk, bqkv_blk],
            out_specs=[qkv_out_blk, qkv_out_blk, qkv_out_blk],
        ),
        compiler_params=pltpu.CompilerParams(
            dimension_semantics=("parallel", "parallel"),
            vmem_limit_bytes=_vmem_limit(vmem_a)),
        cost_estimate=qkv_cost,
    )(x_seq, scale, shift, w_qkv, b_qkv)

    # ---------------- Kernel B: KV-resident flash attention + out proj -------
    if tq is None:
        tq = _choose_tile(L, (512, 256, 128, 64, 32, 16))
        # keep >= 2 query tiles at N == 1 so megacore (v7x) still has work
        if n == 1 and tq == L and L % 2 == 0:
            tq = _choose_tile(L // 2, (512, 256, 128, 64, 32, 16))
    tk = tk or _choose_tile(L, (1024, 512, 256, 128, 64, 32, 16))
    assert L % tq == 0 and L % tk == 0

    q_blk = pl.BlockSpec((1, tq, c), lambda b, qi: (b, qi, 0))
    kv_blk = pl.BlockSpec((1, L, c), lambda b, qi: (b, 0, 0))   # resident per b
    res_blk = pl.BlockSpec((1, c, tq), lambda b, qi: (b, 0, qi))
    woT_blk = pl.BlockSpec((c, c), lambda b, qi: (0, 0))
    bo_blk = pl.BlockSpec((c, 1), lambda b, qi: (0, 0))
    o_blk = pl.BlockSpec((1, c, tq), lambda b, qi: (b, 0, qi))

    attn_cost = pl.CostEstimate(
        flops=4 * n * L * L * c + 2 * n * L * c * c,
        transcendentals=n * L * L,
        bytes_accessed=(n * L * c * 2            # q read once
                        + 2 * n * L * c * 2      # K, V read once per batch
                        + n * L * c * 4          # residual read
                        + n * L * c * 4          # output write
                        + c * c * 2 + c * 4),    # wo, bo
    )
    vmem_b = (2 * 2 * (L * c * 2)                # K, V double-buffered
              + 2 * (tq * c * 2)                 # q tile
              + 2 * (c * tq * 4)                 # residual tile
              + 2 * (c * tq * 4)                 # output tile
              + 2 * (c * c * 2 + c * 4)          # woT, bo
              + tq * c * 4) + (4 << 20)          # accumulator + margin

    out_cm = pl.pallas_call(
        functools.partial(_flash_attn_out_kernel, tk=tk),
        out_shape=jax.ShapeDtypeStruct((n, c, L), jnp.float32),
        grid_spec=pltpu.PrefetchScalarGridSpec(
            num_scalar_prefetch=0,
            grid=(n, L // tq),
            in_specs=[q_blk, kv_blk, kv_blk, res_blk, woT_blk, bo_blk],
            out_specs=o_blk,
        ),
        compiler_params=pltpu.CompilerParams(
            dimension_semantics=("parallel", "parallel"),
            vmem_limit_bytes=_vmem_limit(vmem_b)),
        cost_estimate=attn_cost,
    )(q, k, v, x_res, woT, bo_col)

    out = out_cm.reshape(n, c, h, w)             # channel-major -> NCHW is free
    return out.astype(x_nchw.dtype)


def make_params(key, channels):
    """Deterministic synthetic parameters (shapes match the nn.Module)."""
    keys = jax.random.split(key, 10)
    c = channels
    s = 0.05
    return {
        "gamma": 1.0 + s * jax.random.normal(keys[0], (c,), jnp.float32),
        "beta": s * jax.random.normal(keys[1], (c,), jnp.float32),
        # "y = x @ W + b" convention (already transposed vs. torch Linear).
        "wq": s * jax.random.normal(keys[2], (c, c), jnp.float32),
        "wk": s * jax.random.normal(keys[3], (c, c), jnp.float32),
        "wv": s * jax.random.normal(keys[4], (c, c), jnp.float32),
        "wo": s * jax.random.normal(keys[5], (c, c), jnp.float32),
        "bq": s * jax.random.normal(keys[6], (c,), jnp.float32),
        "bk": s * jax.random.normal(keys[7], (c,), jnp.float32),
        "bv": s * jax.random.normal(keys[8], (c,), jnp.float32),
        "bo": s * jax.random.normal(keys[9], (c,), jnp.float32),
    }


def reference(x, params):
    """Pure-JAX reference mirroring the PyTorch forward exactly (f32)."""
    n, c, h, w = x.shape
    g = NUM_GROUPS
    xr = x.reshape(n, g, c // g, h, w)
    mean = xr.mean(axis=(2, 3, 4), keepdims=True)
    var = xr.var(axis=(2, 3, 4), keepdims=True)
    xn = (xr - mean) / jnp.sqrt(var + EPS)
    xn = xn.reshape(n, c, h, w)
    xn = xn * params["gamma"].reshape(1, c, 1, 1) + params["beta"].reshape(1, c, 1, 1)

    xs = jnp.transpose(xn.reshape(n, c, h * w), (0, 2, 1))  # (N, L, C)
    q = xs @ params["wq"] + params["bq"]
    k = xs @ params["wk"] + params["bk"]
    v = xs @ params["wv"] + params["bv"]
    scores = jnp.einsum("nlc,nmc->nlm", q, k) / math.sqrt(c)
    p = jax.nn.softmax(scores, axis=-1)
    o = jnp.einsum("nlm,nmc->nlc", p, v)
    o = o @ params["wo"] + params["bo"]
    o = jnp.transpose(o, (0, 2, 1)).reshape(n, c, h, w)
    return o + x


if __name__ == "__main__":
    key = jax.random.PRNGKey(0)
    k_x, k_p = jax.random.split(key)

    # C=128 keeps the channel (lane) dim vreg/MXU aligned; L=256 with
    # tm=tq=tk=128 exercises the multi-tile grids and the in-kernel
    # online-softmax accumulation across key chunks.
    N, C, H, W = 2, 128, 16, 16   # C must be divisible by 32 (GroupNorm)
    x = jax.random.normal(k_x, (N, C, H, W), jnp.float32)
    params = make_params(k_p, C)

    out = vae_attention_block(x, params, tm=128, tq=128, tk=128)
    out = jax.block_until_ready(out)

    ref = reference(x, params)
    assert out.shape == (N, C, H, W)
    max_err = float(jnp.max(jnp.abs(out - ref)))
    assert jnp.allclose(out, ref, rtol=2.5e-2, atol=2.5e-2), (
        f"mismatch vs reference, max abs err = {max_err}")

    print("KERNEL_OK")
</pallas_src>

<mosaic_0001>
module attributes {stable_mosaic.version = 11 : i64} {
  func.func @_norm_qkv_kernel(%arg0: i32, %arg1: i32, %arg2: memref<1x128x128xf32, #tpu.memory_space<vmem>>, %arg3: memref<1x1x128xf32, #tpu.memory_space<vmem>>, %arg4: memref<1x1x128xf32, #tpu.memory_space<vmem>>, %arg5: memref<128x384xbf16, #tpu.memory_space<vmem>>, %arg6: memref<1x384xf32, #tpu.memory_space<vmem>>, %arg7: memref<1x128x128xbf16, #tpu.memory_space<vmem>>, %arg8: memref<1x128x128xbf16, #tpu.memory_space<vmem>>, %arg9: memref<1x128x128xbf16, #tpu.memory_space<vmem>>) attributes {dimension_semantics = [#tpu.dimension_semantics<parallel>, #tpu.dimension_semantics<parallel>], iteration_bounds = array<i64: 2, 2>, scalar_prefetch = 0 : i64, scratch_operands = 0 : i64, tpu.core_type = #tpu.core_type<tc>, window_params = [{transform_indices = @transform_0, window_bounds = array<i64: 1, 128, 128>}, {transform_indices = @transform_1, window_bounds = array<i64: 1, 1, 128>}, {transform_indices = @transform_2, window_bounds = array<i64: 1, 1, 128>}, {pipeline_mode = #tpu.pipeline_mode<synchronous>, transform_indices = @transform_3, window_bounds = array<i64: 128, 384>}, {pipeline_mode = #tpu.pipeline_mode<synchronous>, transform_indices = @transform_4, window_bounds = array<i64: 1, 384>}, {transform_indices = @transform_5, window_bounds = array<i64: 1, 128, 128>}, {transform_indices = @transform_6, window_bounds = array<i64: 1, 128, 128>}, {transform_indices = @transform_7, window_bounds = array<i64: 1, 128, 128>}]} {
    %c0 = arith.constant 0 : index
    %c0_0 = arith.constant 0 : index
    %c0_1 = arith.constant 0 : index
    %0 = vector.load %arg2[%c0, %c0_0, %c0_1] : memref<1x128x128xf32, #tpu.memory_space<vmem>>, vector<1x128x128xf32>
    %1 = vector.shape_cast %0 : vector<1x128x128xf32> to vector<128x128xf32>
    %c0_2 = arith.constant 0 : index
    %c0_3 = arith.constant 0 : index
    %c0_4 = arith.constant 0 : index
    %2 = vector.load %arg3[%c0_2, %c0_3, %c0_4] : memref<1x1x128xf32, #tpu.memory_space<vmem>>, vector<1x1x128xf32>
    %3 = vector.shape_cast %2 : vector<1x1x128xf32> to vector<1x128xf32>
    %4 = vector.broadcast %3 : vector<1x128xf32> to vector<128x128xf32>
    %5 = arith.mulf %1, %4 : vector<128x128xf32>
    %c0_5 = arith.constant 0 : index
    %c0_6 = arith.constant 0 : index
    %c0_7 = arith.constant 0 : index
    %6 = vector.load %arg4[%c0_5, %c0_6, %c0_7] : memref<1x1x128xf32, #tpu.memory_space<vmem>>, vector<1x1x128xf32>
    %7 = vector.shape_cast %6 : vector<1x1x128xf32> to vector<1x128xf32>
    %8 = vector.broadcast %7 : vector<1x128xf32> to vector<128x128xf32>
    %9 = arith.addf %5, %8 : vector<128x128xf32>
    %10 = arith.truncf %9 : vector<128x128xf32> to vector<128x128xbf16>
    %c0_8 = arith.constant 0 : index
    %c0_9 = arith.constant 0 : index
    %11 = vector.load %arg5[%c0_8, %c0_9] : memref<128x384xbf16, #tpu.memory_space<vmem>>, vector<128x384xbf16>
    %cst = arith.constant dense<0.000000e+00> : vector<128x384xf32>
    %12 = tpu.matmul %10, %11, %cst {dimension_numbers = #tpu.dot_dimension_numbers<[1], [0], [0], [1], [0, 0, 1, 1], [], []>} : vector<128x128xbf16>, vector<128x384xbf16>, vector<128x384xf32> -> vector<128x384xf32>
    %c0_10 = arith.constant 0 : index
    %c0_11 = arith.constant 0 : index
    %13 = vector.load %arg6[%c0_10, %c0_11] : memref<1x384xf32, #tpu.memory_space<vmem>>, vector<1x384xf32>
    %14 = vector.broadcast %13 : vector<1x384xf32> to vector<128x384xf32>
    %15 = arith.addf %12, %14 : vector<128x384xf32>
    %16 = vector.extract_strided_slice %15 {offsets = [0, 0], sizes = [128, 128], strides = [1, 1]} : vector<128x384xf32> to vector<128x128xf32>
    %17 = arith.truncf %16 : vector<128x128xf32> to vector<128x128xbf16>
    %c0_12 = arith.constant 0 : index
    %c0_13 = arith.constant 0 : index
    %c0_14 = arith.constant 0 : index
    %18 = vector.load %arg7[%c0_12, %c0_13, %c0_14] : memref<1x128x128xbf16, #tpu.memory_space<vmem>>, vector<1x128x128xbf16>
    %19 = vector.shape_cast %18 : vector<1x128x128xbf16> to vector<128x128xbf16>
    %20 = vector.shape_cast %17 : vector<128x128xbf16> to vector<1x128x128xbf16>
    tpu.vector_store %arg7[%c0_12, %c0_13, %c0_14], %20 {strides = array<i32>} : memref<1x128x128xbf16, #tpu.memory_space<vmem>>, vector<1x128x128xbf16>,
    %21 = vector.extract_strided_slice %15 {offsets = [0, 128], sizes = [128, 128], strides = [1, 1]} : vector<128x384xf32> to vector<128x128xf32>
    %22 = arith.truncf %21 : vector<128x128xf32> to vector<128x128xbf16>
    %c0_15 = arith.constant 0 : index
    %c0_16 = arith.constant 0 : index
    %c0_17 = arith.constant 0 : index
    %23 = vector.load %arg8[%c0_15, %c0_16, %c0_17] : memref<1x128x128xbf16, #tpu.memory_space<vmem>>, vector<1x128x128xbf16>
    %24 = vector.shape_cast %23 : vector<1x128x128xbf16> to vector<128x128xbf16>
    %25 = vector.shape_cast %22 : vector<128x128xbf16> to vector<1x128x128xbf16>
    tpu.vector_store %arg8[%c0_15, %c0_16, %c0_17], %25 {strides = array<i32>} : memref<1x128x128xbf16, #tpu.memory_space<vmem>>, vector<1x128x128xbf16>,
    %26 = vector.extract_strided_slice %15 {offsets = [0, 256], sizes = [128, 128], strides = [1, 1]} : vector<128x384xf32> to vector<128x128xf32>
    %27 = arith.truncf %26 : vector<128x128xf32> to vector<128x128xbf16>
    %c0_18 = arith.constant 0 : index
    %c0_19 = arith.constant 0 : index
    %c0_20 = arith.constant 0 : index
    %28 = vector.load %arg9[%c0_18, %c0_19, %c0_20] : memref<1x128x128xbf16, #tpu.memory_space<vmem>>, vector<1x128x128xbf16>
    %29 = vector.shape_cast %28 : vector<1x128x128xbf16> to vector<128x128xbf16>
    %30 = vector.shape_cast %27 : vector<128x128xbf16> to vector<1x128x128xbf16>
    tpu.vector_store %arg9[%c0_18, %c0_19, %c0_20], %30 {strides = array<i32>} : memref<1x128x128xbf16, #tpu.memory_space<vmem>>, vector<1x128x128xbf16>,
    return
  }
  func.func @transform_0(%arg0: i32, %arg1: i32) -> (i32, i32, i32) {
    %c0_i32 = arith.constant 0 : i32
    %c0_i32_0 = arith.constant 0 : i32
    return %arg0, %arg1, %c0_i32 : i32, i32, i32
  }
  func.func @transform_1(%arg0: i32, %arg1: i32) -> (i32, i32, i32) {
    %c0_i32 = arith.constant 0 : i32
    %c0_i32_0 = arith.constant 0 : i32
    %c0_i32_1 = arith.constant 0 : i32
    return %arg0, %c0_i32, %c0_i32_0 : i32, i32, i32
  }
  func.func @transform_2(%arg0: i32, %arg1: i32) -> (i32, i32, i32) {
    %c0_i32 = arith.constant 0 : i32
    %c0_i32_0 = arith.constant 0 : i32
    %c0_i32_1 = arith.constant 0 : i32
    return %arg0, %c0_i32, %c0_i32_0 : i32, i32, i32
  }
  func.func @transform_3(%arg0: i32, %arg1: i32) -> (i32, i32) {
    %c0_i32 = arith.constant 0 : i32
    %c0_i32_0 = arith.constant 0 : i32
    %c0_i32_1 = arith.constant 0 : i32
    return %c0_i32, %c0_i32_0 : i32, i32
  }
  func.func @transform_4(%arg0: i32, %arg1: i32) -> (i32, i32) {
    %c0_i32 = arith.constant 0 : i32
    %c0_i32_0 = arith.constant 0 : i32
    %c0_i32_1 = arith.constant 0 : i32
    return %c0_i32, %c0_i32_0 : i32, i32
  }
  func.func @transform_5(%arg0: i32, %arg1: i32) -> (i32, i32, i32) {
    %c0_i32 = arith.constant 0 : i32
    %c0_i32_0 = arith.constant 0 : i32
    return %arg0, %arg1, %c0_i32 : i32, i32, i32
  }
  func.func @transform_6(%arg0: i32, %arg1: i32) -> (i32, i32, i32) {
    %c0_i32 = arith.constant 0 : i32
    %c0_i32_0 = arith.constant 0 : i32
    return %arg0, %arg1, %c0_i32 : i32, i32, i32
  }
  func.func @transform_7(%arg0: i32, %arg1: i32) -> (i32, i32, i32) {
    %c0_i32 = arith.constant 0 : i32
    %c0_i32_0 = arith.constant 0 : i32
    return %arg0, %arg1, %c0_i32 : i32, i32, i32
  }
}

</mosaic_0001>

<llo_original>
// kernel: tpu_custom_call.1
$region0: #{tpu_custom_call.1}
  #allocation0 [shape = 'u32[]', space=smem, size = 0x4, offset = 0x4, fixed_abs, tag = 'smem constant byte address 0x4 - core index']
  #allocation1 [shape = 'u32[144,128]{1,0:T(1,128)}', space=vmem, size = 0x12000, scoped, tag = 'internal scratch']
  %s0 = inlined_call_operand.hbm [shape: f32[2,256,128], index: 0, kind: input, shape index: {}]
  %s1 = inlined_call_operand.hbm [shape: f32[2,1,128], index: 1, kind: input, shape index: {}]
  %s2 = inlined_call_operand.vmem [shape: f32[2,1,128], index: 2, kind: input, shape index: {}]
  %s3 = inlined_call_operand.hbm [shape: bf16[128,384], index: 3, kind: input, shape index: {}]
  %s4 = inlined_call_operand.vmem [shape: f32[1,384], index: 4, kind: input, shape index: {}]
  %s5 = inlined_call_operand.hbm [shape: bf16[2,256,128], index: 5, kind: output, shape index: {0}]
  %s6 = inlined_call_operand.hbm [shape: bf16[2,256,128], index: 6, kind: output, shape index: {1}]
  %s7 = inlined_call_operand.hbm [shape: bf16[2,256,128], index: 7, kind: output, shape index: {2}]
  %8 = xla_tuple %s5, %s6, %s7
  %s9 = sld [smem:[#allocation0]]
  $region81: #{tpu_custom_call.1} parent=0
    _
  %s11 = ssub.s32 1, %s9
  %s12 = scalar_select 0, %s11, %s9
  $region1: #{tpu_custom_call.1} parent=0
    #allocation2 [shape = 'u8[131072]{0}', space=vmem, size = 0x20000, scoped, tag = 'input window, operand 0']
    #allocation3 [shape = 's32[2]{0}', space=sflag, size = 0x8, scoped, tag = 'scoped memory for tpu_custom_call.1']
    #allocation4 [shape = 's32[2]{0}', space=sflag, size = 0x8, scoped, tag = 'scoped memory for tpu_custom_call.1']
    #allocation5 [shape = 'u8[1024]{0}', space=vmem, size = 0x400, scoped, tag = 'input window, operand 1']
    #allocation6 [shape = 's32[2]{0}', space=sflag, size = 0x8, scoped, tag = 'scoped memory for tpu_custom_call.1']
    #allocation7 [shape = 'u8[98304]{0}', space=vmem, size = 0x18000, scoped, tag = 'input window, operand 3, single buffered']
    #allocation8 [shape = 'u8[65536]{0}', space=vmem, size = 0x10000, scoped, tag = 'output window, operand 0']
    #allocation9 [shape = 'u8[65536]{0}', space=vmem, size = 0x10000, scoped, tag = 'output window, operand 1']
    #allocation10 [shape = 's32[2]{0}', space=sflag, size = 0x8, scoped, tag = 'scoped memory for tpu_custom_call.1']
    #allocation11 [shape = 'u8[65536]{0}', space=vmem, size = 0x10000, scoped, tag = 'output window, operand 2']
    %13 = vsyncpa [#allocation3], 0
    %s14 = scalar_lea.sflag [#allocation3], 1
    %15 = vsyncpa %s14, 0
    %16 = vsyncpa [#allocation6], 0
    %s17 = scalar_lea.sflag [#allocation6], 1
    %18 = vsyncpa %s17, 0
    %19 = vsyncpa [#allocation4], 0
    %s20 = scalar_lea.sflag [#allocation4], 1
    %21 = vsyncpa %s20, 0
    %22 = vsyncpa [#allocation10], 0
    %s23 = scalar_lea.sflag [#allocation10], 1
    %24 = vsyncpa %s23, 0
    loop: start=0, step=1, limit=6
    $region2: #{tpu_custom_call.1} parent=1 // loop_pre_header
      _
    $region3: #{tpu_custom_call.1} parent=1 // loop_header
      %s26 = sphi 0, %s30
      %p27 = scmp.ge.s32.totalorder %s26, 6
      %s33 = sphi 0, %s45
      %s34 = sphi 0, %s41
      %s35 = sphi 0, %s33
      %s36 = sphi 0, %s34
      %s37 = sphi 0, %s35
      %s38 = sphi 0, %s36
      %s50 = sphi 0, %s52
      %s53 = sphi 0, %s50
      %s54 = sphi 0, %s53
      %s70 = sphi 0, %s54
      %s76 = sphi 0, %s78
      %s79 = sphi 0, %s76
      %s80 = sphi 0, %s79
      %s96 = sphi 0, %s80
      %s102 = sphi 0, %s104
      %s105 = sphi 0, %s102
      %s106 = sphi 0, %s105
      %s122 = sphi 0, %s106
      %s126 = sphi 0, %s126
      %s128 = sphi 0, %s126
      %s129 = sphi 0, %s128
      %s143 = sphi 0, %s129
      %s147 = sphi 0, %s147
      %s149 = sphi 0, %s147
      %s150 = sphi 0, %s149
      %s164 = sphi 0, %s150
      %s172 = sphi 0, %s174
      %s175 = sphi 0, %s172
      %s176 = sphi 0, %s175
      %s192 = sphi 0, %s176
      %s200 = sphi 0, %s202
      %s203 = sphi 0, %s200
      %s204 = sphi 0, %s203
      %s220 = sphi 0, %s204
      %s228 = sphi 0, %s230
      %s231 = sphi 0, %s228
      %s232 = sphi 0, %s231
      %s248 = sphi 0, %s232
    $region4: #{tpu_custom_call.1} parent=1 // loop_header_branch
      %29 = sbr.rel (%p27) target = $region8
    $region5: #{tpu_custom_call.1} parent=1 // loop_body
      %s31 = ssub.s32 %s26, 1
      %s32 = ssub.s32 %s26, 2
      %s39 = sadd.s32 1, %s34
      %p40 = scmp.ge.s32.totalorder %s39, 2
      %s41 = scalar_select %p40, 0, %s39
      %s42 = sadd.s32 1, %s33
      %s43 = scalar_select %p40, %s42, %s33
      %p44 = scmp.ge.s32.totalorder %s43, 2
      %s45 = scalar_select %p44, 0, %s43
      %s46 = ssub.s32 %s33, %s45
      %s47 = ssub.s32 %s34, %s41
      %s48 = sor.u32 %s46, %s47
      %p49 = scmp.eq.s32.totalorder %s48, 0
      %s51 = sadd.s32 %s50, 1
      %s52 = scalar_select %p49, %s50, %s51
      %p55 = pneg %p49
      %p56 = scmp.eq.s32.totalorder %s26, 3
      %p57 = por %p55, %p56
      %p58 = scmp.ne.s32.totalorder %s50, %s53
      %p59 = scmp.eq.s32.totalorder %s26, 0
      %p60 = por %p58, %p59
      %p61 = scmp.ne.s32.totalorder %s50, %s53
      %p62 = scmp.eq.s32.totalorder %s31, 3
      %p63 = por %p61, %p62
      %p64 = scmp.ne.s32.totalorder %s53, %s54
      %p65 = scmp.eq.s32.totalorder %s31, 0
      %p66 = por %p64, %p65
      %p67 = scmp.ne.s32.totalorder %s53, %s54
      %p68 = scmp.eq.s32.totalorder %s32, 3
      %p69 = por %p67, %p68
      %p71 = scmp.ne.s32.totalorder %s54, %s70
      %p72 = scmp.eq.s32.totalorder %s32, 0
      %p73 = por %p71, %p72
      %s74 = ssub.s32 %s33, %s45
      %p75 = scmp.eq.s32.totalorder %s74, 0
      %s77 = sadd.s32 %s76, 1
      %s78 = scalar_select %p75, %s76, %s77
      %p81 = pneg %p75
      %p82 = scmp.eq.s32.totalorder %s26, 3
      %p83 = por %p81, %p82
      %p84 = scmp.ne.s32.totalorder %s76, %s79
      %p85 = scmp.eq.s32.totalorder %s26, 0
      %p86 = por %p84, %p85
      %p87 = scmp.ne.s32.totalorder %s76, %s79
      %p88 = scmp.eq.s32.totalorder %s31, 3
      %p89 = por %p87, %p88
      %p90 = scmp.ne.s32.totalorder %s79, %s80
      %p91 = scmp.eq.s32.totalorder %s31, 0
      %p92 = por %p90, %p91
      %p93 = scmp.ne.s32.totalorder %s79, %s80
      %p94 = scmp.eq.s32.totalorder %s32, 3
      %p95 = por %p93, %p94
      %p97 = scmp.ne.s32.totalorder %s80, %s96
      %p98 = scmp.eq.s32.totalorder %s32, 0
      %p99 = por %p97, %p98
      %s100 = ssub.s32 %s33, %s45
      %p101 = scmp.eq.s32.totalorder %s100, 0
      %s103 = sadd.s32 %s102, 1
      %s104 = scalar_select %p101, %s102, %s103
      %p107 = pneg %p101
      %p108 = scmp.eq.s32.totalorder %s26, 3
      %p109 = por %p107, %p108
      %p110 = scmp.ne.s32.totalorder %s102, %s105
      %p111 = scmp.eq.s32.totalorder %s26, 0
      %p112 = por %p110, %p111
      %p113 = scmp.ne.s32.totalorder %s102, %s105
      %p114 = scmp.eq.s32.totalorder %s31, 3
      %p115 = por %p113, %p114
      %p116 = scmp.ne.s32.totalorder %s105, %s106
      %p117 = scmp.eq.s32.totalorder %s31, 0
      %p118 = por %p116, %p117
      %p119 = scmp.ne.s32.totalorder %s105, %s106
      %p120 = scmp.eq.s32.totalorder %s32, 3
      %p121 = por %p119, %p120
      %p123 = scmp.ne.s32.totalorder %s106, %s122
      %p124 = scmp.eq.s32.totalorder %s32, 0
      %p125 = por %p123, %p124
      %s127 = sadd.s32 %s126, 1
      %p130 = scmp.eq.s32.totalorder %s26, 3
      %p131 = scmp.ne.s32.totalorder %s126, %s128
      %p132 = scmp.eq.s32.totalorder %s26, 0
      %p133 = por %p131, %p132
      %p134 = scmp.ne.s32.totalorder %s126, %s128
      %p135 = scmp.eq.s32.totalorder %s31, 3
      %p136 = por %p134, %p135
      %p137 = scmp.ne.s32.totalorder %s128, %s129
      %p138 = scmp.eq.s32.totalorder %s31, 0
      %p139 = por %p137, %p138
      %p140 = scmp.ne.s32.totalorder %s128, %s129
      %p141 = scmp.eq.s32.totalorder %s32, 3
      %p142 = por %p140, %p141
      %p144 = scmp.ne.s32.totalorder %s129, %s143
      %p145 = scmp.eq.s32.totalorder %s32, 0
      %p146 = por %p144, %p145
      %s148 = sadd.s32 %s147, 1
      %p151 = scmp.eq.s32.totalorder %s26, 3
      %p152 = scmp.ne.s32.totalorder %s147, %s149
      %p153 = scmp.eq.s32.totalorder %s26, 0
      %p154 = por %p152, %p153
      %p155 = scmp.ne.s32.totalorder %s147, %s149
      %p156 = scmp.eq.s32.totalorder %s31, 3
      %p157 = por %p155, %p156
      %p158 = scmp.ne.s32.totalorder %s149, %s150
      %p159 = scmp.eq.s32.totalorder %s31, 0
      %p160 = por %p158, %p159
      %p161 = scmp.ne.s32.totalorder %s149, %s150
      %p162 = scmp.eq.s32.totalorder %s32, 3
      %p163 = por %p161, %p162
      %p165 = scmp.ne.s32.totalorder %s150, %s164
      %p166 = scmp.eq.s32.totalorder %s32, 0
      %p167 = por %p165, %p166
      %s168 = ssub.s32 %s33, %s45
      %s169 = ssub.s32 %s34, %s41
      %s170 = sor.u32 %s168, %s169
      %p171 = scmp.eq.s32.totalorder %s170, 0
      %s173 = sadd.s32 %s172, 1
      %s174 = scalar_select %p171, %s172, %s173
      %p177 = pneg %p171
      %p178 = scmp.eq.s32.totalorder %s26, 3
      %p179 = por %p177, %p178
      %p180 = scmp.ne.s32.totalorder %s172, %s175
      %p181 = scmp.eq.s32.totalorder %s26, 0
      %p182 = por %p180, %p181
      %p183 = scmp.ne.s32.totalorder %s172, %s175
      %p184 = scmp.eq.s32.totalorder %s31, 3
      %p185 = por %p183, %p184
      %p186 = scmp.ne.s32.totalorder %s175, %s176
      %p187 = scmp.eq.s32.totalorder %s31, 0
      %p188 = por %p186, %p187
      %p189 = scmp.ne.s32.totalorder %s175, %s176
      %p190 = scmp.eq.s32.totalorder %s32, 3
      %p191 = por %p189, %p190
      %p193 = scmp.ne.s32.totalorder %s176, %s192
      %p194 = scmp.eq.s32.totalorder %s32, 0
      %p195 = por %p193, %p194
      %s196 = ssub.s32 %s33, %s45
      %s197 = ssub.s32 %s34, %s41
      %s198 = sor.u32 %s196, %s197
      %p199 = scmp.eq.s32.totalorder %s198, 0
      %s201 = sadd.s32 %s200, 1
      %s202 = scalar_select %p199, %s200, %s201
      %p205 = pneg %p199
      %p206 = scmp.eq.s32.totalorder %s26, 3
      %p207 = por %p205, %p206
      %p208 = scmp.ne.s32.totalorder %s200, %s203
      %p209 = scmp.eq.s32.totalorder %s26, 0
      %p210 = por %p208, %p209
      %p211 = scmp.ne.s32.totalorder %s200, %s203
      %p212 = scmp.eq.s32.totalorder %s31, 3
      %p213 = por %p211, %p212
      %p214 = scmp.ne.s32.totalorder %s203, %s204
      %p215 = scmp.eq.s32.totalorder %s31, 0
      %p216 = por %p214, %p215
      %p217 = scmp.ne.s32.totalorder %s203, %s204
      %p218 = scmp.eq.s32.totalorder %s32, 3
      %p219 = por %p217, %p218
      %p221 = scmp.ne.s32.totalorder %s204, %s220
      %p222 = scmp.eq.s32.totalorder %s32, 0
      %p223 = por %p221, %p222
      %s224 = ssub.s32 %s33, %s45
      %s225 = ssub.s32 %s34, %s41
      %s226 = sor.u32 %s224, %s225
      %p227 = scmp.eq.s32.totalorder %s226, 0
      %s229 = sadd.s32 %s228, 1
      %s230 = scalar_select %p227, %s228, %s229
      %p233 = pneg %p227
      %p234 = scmp.eq.s32.totalorder %s26, 3
      %p235 = por %p233, %p234
      %p236 = scmp.ne.s32.totalorder %s228, %s231
      %p237 = scmp.eq.s32.totalorder %s26, 0
      %p238 = por %p236, %p237
      %p239 = scmp.ne.s32.totalorder %s228, %s231
      %p240 = scmp.eq.s32.totalorder %s31, 3
      %p241 = por %p239, %p240
      %p242 = scmp.ne.s32.totalorder %s231, %s232
      %p243 = scmp.eq.s32.totalorder %s31, 0
      %p244 = por %p242, %p243
      %p245 = scmp.ne.s32.totalorder %s231, %s232
      %p246 = scmp.eq.s32.totalorder %s32, 3
      %p247 = por %p245, %p246
      %p249 = scmp.ne.s32.totalorder %s232, %s248
      %p250 = scmp.eq.s32.totalorder %s32, 0
      %p251 = por %p249, %p250
      %p252 = scmp.le.s32.totalorder 1, %s26
      %p253 = scmp.lt.s32.totalorder %s26, 5
      %p254 = pnand %p252, %p253
      %p255 = pneg %p254
      // Predicated region
      $region9: #{tpu_custom_call.1} parent=5 // pred_check
        _
      $region10: #{tpu_custom_call.1} parent=5 // pred_check_branch
        %257 = sbr.rel (%p254) target = $region12
      $region11: #{tpu_custom_call.1} parent=5 // pred_region
        %s258 = ssub.s32 %s26, 1
        // Predicated region
        $region13: #{tpu_custom_call.1} parent=11 // pred_check
          %p259 = pneg %p139
        $region14: #{tpu_custom_call.1} parent=11 // pred_check_branch
          %261 = sbr.rel (%p259) target = $region16
        $region15: #{tpu_custom_call.1} parent=11 // pred_region
          %s263 = ssub.s32 3072, 3072
          %264 = vsyncadd [#allocation6], %s263
          %s265 = sshll.u32 [#allocation7], 4
          %s266 = int_to_ptr.vmem [resolvable:$true] %s265
          %271 = dma.hbm_to_vmem [thread:$0]  %s3, 3072, %s266, [#allocation6], 192, 192, 12
        $region16: #{tpu_custom_call.1} parent=11 // pred_fallthru
          _
        // Predicated region
        $region17: #{tpu_custom_call.1} parent=11 // pred_check
          %p272 = pneg %p160
        $region18: #{tpu_custom_call.1} parent=11 // pred_check_branch
          %274 = sbr.rel (%p272) target = $region20
        $region19: #{tpu_custom_call.1} parent=11 // pred_region
          _
        $region20: #{tpu_custom_call.1} parent=11 // pred_fallthru
          _
      $region12: #{tpu_custom_call.1} parent=5 // pred_fallthru
        _
      %p275 = scmp.lt.s32.totalorder %s26, 4
      // Predicated region
      $region21: #{tpu_custom_call.1} parent=5 // pred_check
        %p276 = pneg %p275
      $region22: #{tpu_custom_call.1} parent=5 // pred_check_branch
        %278 = sbr.rel (%p276) target = $region24
      $region23: #{tpu_custom_call.1} parent=5 // pred_region
        // Predicated region
        $region25: #{tpu_custom_call.1} parent=23 // pred_check
          %p279 = pneg %p60
        $region26: #{tpu_custom_call.1} parent=23 // pred_check_branch
          %281 = sbr.rel (%p279) target = $region28
        $region27: #{tpu_custom_call.1} parent=23 // pred_region
          %s282 = sand.u32 %s50, 1
          %s283 = scalar_lea.sflag [#allocation3], %s282
          %s284 = sand.u32 %s50, 1
          %s285 = smul.addr %s284, 128
          %s286 = scalar_lea.vmem [#allocation2], %s285
          %s287 = smul.u32 16, %s34
          %s289 = ssub.s32 2048, 2048
          %290 = vsyncadd %s283, %s289
          %s291 = smul.addr %s33, 32
          %s292 = sadd.s32 %s287, %s291
          %s293 = smul.addr %s292, 128
          %s294 = scalar_lea.hbm %s0, %s293
          %s295 = sshll.u32 %s286, 4
          %s296 = int_to_ptr.vmem [resolvable:$true] %s295
          %301 = dma.hbm_to_vmem [thread:$0]  %s294, 2048, %s296, %s283, 128, 128, 8
        $region28: #{tpu_custom_call.1} parent=23 // pred_fallthru
          _
        // Predicated region
        $region29: #{tpu_custom_call.1} parent=23 // pred_check
          %p302 = pneg %p86
        $region30: #{tpu_custom_call.1} parent=23 // pred_check_branch
          %304 = sbr.rel (%p302) target = $region32
        $region31: #{tpu_custom_call.1} parent=23 // pred_region
          %s305 = sand.u32 %s26, 1
          %s306 = scalar_lea.sflag [#allocation6], %s305
          %s307 = sand.u32 %s76, 1
          %s308 = scalar_lea.vmem [#allocation5], %s307
          %s310 = ssub.s32 16, 16
          %311 = vsyncadd %s306, %s310
          %s312 = smul.addr %s33, 16
          %s313 = scalar_lea.hbm %s1, %s312
          %s315 = sshll.u32 %s308, 4
          %s316 = int_to_ptr.vmem [resolvable:$true] %s315
          %318 = dma.hbm_to_vmem [thread:$0]  %s313, 16, %s316, %s306
        $region32: #{tpu_custom_call.1} parent=23 // pred_fallthru
          _
        // Predicated region
        $region33: #{tpu_custom_call.1} parent=23 // pred_check
          %p319 = pneg %p112
        $region34: #{tpu_custom_call.1} parent=23 // pred_check_branch
          %321 = sbr.rel (%p319) target = $region36
        $region35: #{tpu_custom_call.1} parent=23 // pred_region
          %p322 = scmp.lt.s32.totalorder %s33, 1
          %s323 = scalar_select %p322, %s33, 1
          %s324 = scalar_lea.vmem %s2, %s323
        $region36: #{tpu_custom_call.1} parent=23 // pred_fallthru
          _
      $region24: #{tpu_custom_call.1} parent=5 // pred_fallthru
        _
      %p325 = scmp.le.s32.totalorder 1, %s26
      %p326 = scmp.lt.s32.totalorder %s26, 5
      %p327 = pnand %p325, %p326
      %p328 = pneg %p327
      // Predicated region
      $region37: #{tpu_custom_call.1} parent=5 // pred_check
        _
      $region38: #{tpu_custom_call.1} parent=5 // pred_check_branch
        %330 = sbr.rel (%p327) target = $region40
      $region39: #{tpu_custom_call.1} parent=5 // pred_region
        %s331 = ssub.s32 %s26, 1
        %s332 = sand.u32 %s53, 1
        %s333 = scalar_lea.sflag [#allocation3], %s332
        %s334 = sand.u32 %s53, 1
        %s335 = smul.addr %s334, 128
        %s336 = scalar_lea.vmem [#allocation2], %s335
        // Predicated region
        $region41: #{tpu_custom_call.1} parent=39 // pred_check
          %p337 = pneg %p66
        $region42: #{tpu_custom_call.1} parent=39 // pred_check_branch
          %339 = sbr.rel (%p337) target = $region44
        $region43: #{tpu_custom_call.1} parent=39 // pred_region
          %340 = dma.done %s333, 2048
        $region44: #{tpu_custom_call.1} parent=39 // pred_fallthru
          _
        %s341 = sand.u32 %s31, 1
        %s342 = scalar_lea.sflag [#allocation6], %s341
        %s343 = sand.u32 %s79, 1
        %s344 = scalar_lea.vmem [#allocation5], %s343
        // Predicated region
        $region45: #{tpu_custom_call.1} parent=39 // pred_check
          %p345 = pneg %p92
        $region46: #{tpu_custom_call.1} parent=39 // pred_check_branch
          %347 = sbr.rel (%p345) target = $region48
        $region47: #{tpu_custom_call.1} parent=39 // pred_region
          %348 = dma.done %s342, 16
        $region48: #{tpu_custom_call.1} parent=39 // pred_fallthru
          _
        // Predicated region
        $region49: #{tpu_custom_call.1} parent=39 // pred_check
          %p349 = pneg %p139
        $region50: #{tpu_custom_call.1} parent=39 // pred_check_branch
          %351 = sbr.rel (%p349) target = $region52
        $region51: #{tpu_custom_call.1} parent=39 // pred_region
          %352 = dma.done [#allocation6], 3072
        $region52: #{tpu_custom_call.1} parent=39 // pred_fallthru
          _
        %s353 = sand.u32 %s53, 1
        %s354 = scalar_lea.sflag [#allocation3], %s353
        %s355 = sand.u32 %s53, 1
        %s356 = smul.addr %s355, 128
        %s357 = scalar_lea.vmem [#allocation2], %s356
        %p358 = pneg %p66
        %p359 = pneg %p63
        %s360 = sand.u32 %s31, 1
        %s361 = scalar_lea.sflag [#allocation6], %s360
        %s362 = sand.u32 %s79, 1
        %s363 = scalar_lea.vmem [#allocation5], %s362
        %p364 = pneg %p92
        %p365 = pneg %p89
        %p366 = scmp.lt.s32.totalorder %s35, 1
        %s367 = scalar_select %p366, %s35, 1
        %s368 = scalar_lea.vmem %s2, %s367
        %p369 = pneg %p118
        %p370 = pneg %p115
        %p371 = pneg %p139
        %p372 = pneg %p136
        %p373 = pneg %p160
        %p374 = pneg %p157
        %p375 = pneg %p188
        %p376 = pneg %p185
        %s377 = sand.u32 %s175, 1
        %s378 = scalar_lea.sflag [#allocation4], %s377
        %s379 = sand.u32 %s175, 1
        %s380 = smul.addr %s379, 64
        %s381 = scalar_lea.vmem [#allocation8], %s380
        %p382 = pneg %p216
        %p383 = pneg %p213
        %s384 = sand.u32 %s31, 1
        %s385 = scalar_lea.sflag [#allocation10], %s384
        %s386 = sand.u32 %s203, 1
        %s387 = smul.addr %s386, 64
        %s388 = scalar_lea.vmem [#allocation9], %s387
        %p389 = pneg %p244
        %p390 = pneg %p241
        %s391 = sand.u32 %s31, 1
        %s392 = scalar_lea.sflag [#allocation10], %s391
        %s393 = sand.u32 %s231, 1
        %s394 = smul.addr %s393, 64
        %s395 = scalar_lea.vmem [#allocation11], %s394
        %s396 = smul.u32 16, %s36
        %p397 = scmp.lt.s32.totalorder %s35, 1
        %s398 = scalar_select %p397, %s35, 1
        %s399 = scalar_lea.vmem %s2, %s398
        %s400 = smul.u32 16, %s36
        %s401 = smul.u32 16, %s36
        %s402 = smul.u32 16, %s36
        %v404 = vld [vmem:[%s336] sm:$0xff]
        %v405 = vld [vmem:[%s336 + $0x8] sm:$0xff]
        %v406 = vld [vmem:[%s336 + $0x10] sm:$0xff]
        %v407 = vld [vmem:[%s336 + $0x18] sm:$0xff]
        %v408 = vld [vmem:[%s336 + $0x20] sm:$0xff]
        %v409 = vld [vmem:[%s336 + $0x28] sm:$0xff]
        %v410 = vld [vmem:[%s336 + $0x30] sm:$0xff]
        %v411 = vld [vmem:[%s336 + $0x38] sm:$0xff]
        %v412 = vld [vmem:[%s336 + $0x40] sm:$0xff]
        %v413 = vld [vmem:[%s336 + $0x48] sm:$0xff]
        %v414 = vld [vmem:[%s336 + $0x50] sm:$0xff]
        %v415 = vld [vmem:[%s336 + $0x58] sm:$0xff]
        %v416 = vld [vmem:[%s336 + $0x60] sm:$0xff]
        %v417 = vld [vmem:[%s336 + $0x68] sm:$0xff]
        %v418 = vld [vmem:[%s336 + $0x70] sm:$0xff]
        %v419 = vld [vmem:[%s336 + $0x78] sm:$0xff]
        %v420 = vld [vmem:[%s344] sm:$0x1]
        %v422 = vlaneseq
        %v423 = vshrl.u32 %v422, 7
        %v424 = vsub.s32 0, %v423
        %v425 = vrot.slane %v420, %v424
        %v427 = vmul.f32 %v404, %v425
        %v428 = vmul.f32 %v405, %v425
        %v429 = vmul.f32 %v406, %v425
        %v430 = vmul.f32 %v407, %v425
        %v431 = vmul.f32 %v408, %v425
        %v432 = vmul.f32 %v409, %v425
        %v433 = vmul.f32 %v410, %v425
        %v434 = vmul.f32 %v411, %v425
        %v435 = vmul.f32 %v412, %v425
        %v436 = vmul.f32 %v413, %v425
        %v437 = vmul.f32 %v414, %v425
        %v438 = vmul.f32 %v415, %v425
        %v439 = vmul.f32 %v416, %v425
        %v440 = vmul.f32 %v417, %v425
        %v441 = vmul.f32 %v418, %v425
        %v442 = vmul.f32 %v419, %v425
        %v443 = vld [vmem:[%s399] sm:$0x1]
        %v445 = vlaneseq
        %v446 = vshrl.u32 %v445, 7
        %v447 = vsub.s32 0, %v446
        %v448 = vrot.slane %v443, %v447
        %v450 = vadd.f32 %v427, %v448
        %v451 = vadd.f32 %v428, %v448
        %v452 = vadd.f32 %v429, %v448
        %v453 = vadd.f32 %v430, %v448
        %v454 = vadd.f32 %v431, %v448
        %v455 = vadd.f32 %v432, %v448
        %v456 = vadd.f32 %v433, %v448
        %v457 = vadd.f32 %v434, %v448
        %v458 = vadd.f32 %v435, %v448
        %v459 = vadd.f32 %v436, %v448
        %v460 = vadd.f32 %v437, %v448
        %v461 = vadd.f32 %v438, %v448
        %v462 = vadd.f32 %v439, %v448
        %v463 = vadd.f32 %v440, %v448
        %v464 = vadd.f32 %v441, %v448
        %v465 = vadd.f32 %v442, %v448
        %v466 = vpack.c.bf16 %v451, %v450
        %v467 = vpack.c.bf16 %v453, %v452
        %v468 = vpack.c.bf16 %v455, %v454
        %v469 = vpack.c.bf16 %v457, %v456
        %v470 = vpack.c.bf16 %v459, %v458
        %v471 = vpack.c.bf16 %v461, %v460
        %v472 = vpack.c.bf16 %v463, %v462
        %v473 = vpack.c.bf16 %v465, %v464
        %v474 = vld [vmem:[#allocation7] sm:$0xff]
        %v475 = vld [vmem:[#allocation7 + $0x8] sm:$0xf]
        %v476 = vld [vmem:[#allocation7 + $0xc] sm:$0xff]
        %v477 = vld [vmem:[#allocation7 + $0x14] sm:$0xf]
        %v478 = vld [vmem:[#allocation7 + $0x18] sm:$0xff]
        %v479 = vld [vmem:[#allocation7 + $0x20] sm:$0xf]
        %v480 = vld [vmem:[#allocation7 + $0x24] sm:$0xff]
        %v481 = vld [vmem:[#allocation7 + $0x2c] sm:$0xf]
        %v482 = vld [vmem:[#allocation7 + $0x30] sm:$0xff]
        %v483 = vld [vmem:[#allocation7 + $0x38] sm:$0xf]
        %v484 = vld [vmem:[#allocation7 + $0x3c] sm:$0xff]
        %v485 = vld [vmem:[#allocation7 + $0x44] sm:$0xf]
        %v486 = vld [vmem:[#allocation7 + $0x48] sm:$0xff]
        %v487 = vld [vmem:[#allocation7 + $0x50] sm:$0xf]
        %v488 = vld [vmem:[#allocation7 + $0x54] sm:$0xff]
        %v489 = vld [vmem:[#allocation7 + $0x5c] sm:$0xf]
        %v490 = vld [vmem:[#allocation7 + $0x60] sm:$0xff]
        %v491 = vld [vmem:[#allocation7 + $0x68] sm:$0xf]
        %v492 = vld [vmem:[#allocation7 + $0x6c] sm:$0xff]
        %v493 = vld [vmem:[#allocation7 + $0x74] sm:$0xf]
        %v494 = vld [vmem:[#allocation7 + $0x78] sm:$0xff]
        %v495 = vld [vmem:[#allocation7 + $0x80] sm:$0xf]
        %v496 = vld [vmem:[#allocation7 + $0x84] sm:$0xff]
        %v497 = vld [vmem:[#allocation7 + $0x8c] sm:$0xf]
        %v498 = vld [vmem:[#allocation7 + $0x90] sm:$0xff]
        %v499 = vld [vmem:[#allocation7 + $0x98] sm:$0xf]
        %v500 = vld [vmem:[#allocation7 + $0x9c] sm:$0xff]
        %v501 = vld [vmem:[#allocation7 + $0xa4] sm:$0xf]
        %v502 = vld [vmem:[#allocation7 + $0xa8] sm:$0xff]
        %v503 = vld [vmem:[#allocation7 + $0xb0] sm:$0xf]
        %v504 = vld [vmem:[#allocation7 + $0xb4] sm:$0xff]
        %v505 = vld [vmem:[#allocation7 + $0xbc] sm:$0xf]
        %v506 = vld [vmem:[%s4] sm:$0x7]
        %v508 = vlaneseq
        %v509 = vshrl.u32 %v508, 7
        %v510 = vsub.s32 0, %v509
        %v511 = vrot.slane %v506, %v510
        %v512 = vlaneseq
        %v513 = vshrl.u32 %v512, 7
        %v514 = vsub.s32 1, %v513
        %v515 = vrot.slane %v506, %v514
        %v516 = vlaneseq
        %v517 = vshrl.u32 %v516, 7
        %v518 = vsub.s32 2, %v517
        %v519 = vrot.slane %v506, %v518
        %v555 = vunpack.c.l.b16 %v474
        %v556 = vunpack.c.h.b16 %v474
        %v557 = vunpack.c.l.b16 %v475
        %v558 = vunpack.c.l.b16 %v476
        %v559 = vunpack.c.h.b16 %v476
        %v560 = vunpack.c.l.b16 %v477
        %v561 = vunpack.c.l.b16 %v478
        %v562 = vunpack.c.h.b16 %v478
        %v563 = vunpack.c.l.b16 %v479
        %v564 = vunpack.c.l.b16 %v480
        %v565 = vunpack.c.h.b16 %v480
        %v566 = vunpack.c.l.b16 %v481
        %v567 = vunpack.c.l.b16 %v482
        %v568 = vunpack.c.h.b16 %v482
        %v569 = vunpack.c.l.b16 %v483
        %v570 = vunpack.c.l.b16 %v484
        %v571 = vunpack.c.h.b16 %v484
        %v572 = vunpack.c.l.b16 %v485
        %v573 = vunpack.c.l.b16 %v486
        %v574 = vunpack.c.h.b16 %v486
        %v575 = vunpack.c.l.b16 %v487
        %v576 = vunpack.c.l.b16 %v488
        %v577 = vunpack.c.h.b16 %v488
        %v578 = vunpack.c.l.b16 %v489
        %v579 = vunpack.c.l.b16 %v490
        %v580 = vunpack.c.h.b16 %v490
        %v581 = vunpack.c.l.b16 %v491
        %v582 = vunpack.c.l.b16 %v492
        %v583 = vunpack.c.h.b16 %v492
        %v584 = vunpack.c.l.b16 %v493
        %v585 = vunpack.c.l.b16 %v494
        %v586 = vunpack.c.h.b16 %v494
        %v587 = vunpack.c.l.b16 %v495
        %v588 = vunpack.c.l.b16 %v496
        %v589 = vunpack.c.h.b16 %v496
        %v590 = vunpack.c.l.b16 %v497
        %v591 = vunpack.c.l.b16 %v498
        %v592 = vunpack.c.h.b16 %v498
        %v593 = vunpack.c.l.b16 %v499
        %v594 = vunpack.c.l.b16 %v500
        %v595 = vunpack.c.h.b16 %v500
        %v596 = vunpack.c.l.b16 %v501
        %v597 = vunpack.c.l.b16 %v502
        %v598 = vunpack.c.h.b16 %v502
        %v599 = vunpack.c.l.b16 %v503
        %v600 = vunpack.c.l.b16 %v504
        %v601 = vunpack.c.h.b16 %v504
        %v602 = vunpack.c.l.b16 %v505
        %v603 = vpack.c.b16 %v558, %v555
        %v604 = vpack.c.b16 %v559, %v556
        %v605 = vpack.c.b16 %v560, %v557
        %v606 = vpack.c.b16 %v564, %v561
        %v607 = vpack.c.b16 %v565, %v562
        %v608 = vpack.c.b16 %v566, %v563
        %v609 = vpack.c.b16 %v570, %v567
        %v610 = vpack.c.b16 %v571, %v568
        %v611 = vpack.c.b16 %v572, %v569
        %v612 = vpack.c.b16 %v576, %v573
        %v613 = vpack.c.b16 %v577, %v574
        %v614 = vpack.c.b16 %v578, %v575
        %v615 = vpack.c.b16 %v582, %v579
        %v616 = vpack.c.b16 %v583, %v580
        %v617 = vpack.c.b16 %v584, %v581
        %v618 = vpack.c.b16 %v588, %v585
        %v619 = vpack.c.b16 %v589, %v586
        %v620 = vpack.c.b16 %v590, %v587
        %v621 = vpack.c.b16 %v594, %v591
        %v622 = vpack.c.b16 %v595, %v592
        %v623 = vpack.c.b16 %v596, %v593
        %v624 = vpack.c.b16 %v600, %v597
        %v625 = vpack.c.b16 %v601, %v598
        %v626 = vpack.c.b16 %v602, %v599
        %651 = vmatprep.subr.bf16.mxu0 %v625
        %652 = vmatpush1.bf16.msra.mxu0 %v624
        %653 = vmatprep.subr.bf16.mxu0 %v622
        %654 = vmatpush1.bf16.msra.mxu0 %v621
        %655 = vmatprep.subr.bf16.mxu0 %v619
        %656 = vmatpush1.bf16.msra.mxu0 %v618
        %657 = vmatprep.subr.bf16.mxu0 %v616
        %658 = vmatpush1.bf16.msra.mxu0 %v615
        %659 = vmatprep.subr.bf16.mxu0 %v613
        %660 = vmatpush1.bf16.msra.mxu0 %v612
        %661 = vmatprep.subr.bf16.mxu0 %v610
        %662 = vmatpush1.bf16.msra.mxu0 %v609
        %663 = vmatprep.subr.bf16.mxu0 %v607
        %664 = vmatpush1.bf16.msra.mxu0 %v606
        %665 = vmatprep.subr.bf16.mxu0 %v604
        %666 = vmatpush1.bf16.msra.mxu0 %v603
        %667 = vmatprep.subr.bf16.mxu0 0
        %668 = vmatpush2.bf16.msra.mxu0 0
        %669 = vmatprep.subr.bf16.mxu0 0
        %670 = vmatpush2.bf16.msra.mxu0 0
        %671 = vmatprep.subr.bf16.mxu0 0
        %672 = vmatpush2.bf16.msra.mxu0 0
        %673 = vmatprep.subr.bf16.mxu0 0
        %674 = vmatpush2.bf16.msra.mxu0 0
        %675 = vmatprep.subr.bf16.mxu0 0
        %676 = vmatpush2.bf16.msra.mxu0 0
        %677 = vmatprep.subr.bf16.mxu0 0
        %678 = vmatpush2.bf16.msra.mxu0 0
        %679 = vmatprep.subr.bf16.mxu0 0
        %680 = vmatpush2.bf16.msra.mxu0 0
        %681 = vmatprep.subr.bf16.mxu0 0
        %682 = vmatpush2.bf16.msra.mxu0 0
        %683 = vmatprep.mubr.bf16.mxu0 0
        %684 = vmatmul.mubr.bf16.gmra.mxu0 %v466
        %v685 = vpop.f32.mrf.mxu0
        %v686 = vadd.f32 %v511, %v685
        %v687 = vpop.f32.mrf.mxu0
        %v688 = vadd.f32 %v515, %v687
        %v689 = vpop.f32.mrf.mxu0
        %v690 = vadd.f32 %v511, %v689
        %v691 = vpop.f32.mrf.mxu0
        %v692 = vadd.f32 %v515, %v691
        %693 = vmatprep.mubr.bf16.mxu0 0
        %694 = vmatmul.mubr.bf16.gmra.mxu0 %v467
        %v695 = vpop.f32.mrf.mxu0
        %v696 = vadd.f32 %v511, %v695
        %v697 = vpop.f32.mrf.mxu0
        %v698 = vadd.f32 %v515, %v697
        %v699 = vpop.f32.mrf.mxu0
        %v700 = vadd.f32 %v511, %v699
        %v701 = vpop.f32.mrf.mxu0
        %v702 = vadd.f32 %v515, %v701
        %703 = vmatprep.mubr.bf16.mxu0 0
        %704 = vmatmul.mubr.bf16.gmra.mxu0 %v468
        %v705 = vpop.f32.mrf.mxu0
        %v706 = vadd.f32 %v511, %v705
        %v707 = vpop.f32.mrf.mxu0
        %v708 = vadd.f32 %v515, %v707
        %v709 = vpop.f32.mrf.mxu0
        %v710 = vadd.f32 %v511, %v709
        %v711 = vpop.f32.mrf.mxu0
        %v712 = vadd.f32 %v515, %v711
        %713 = vmatprep.mubr.bf16.mxu0 0
        %714 = vmatmul.mubr.bf16.gmra.mxu0 %v469
        %v715 = vpop.f32.mrf.mxu0
        %v716 = vadd.f32 %v511, %v715
        %v717 = vpop.f32.mrf.mxu0
        %v718 = vadd.f32 %v515, %v717
        %v719 = vpop.f32.mrf.mxu0
        %v720 = vadd.f32 %v511, %v719
        %v721 = vpop.f32.mrf.mxu0
        %v722 = vadd.f32 %v515, %v721
        %723 = vmatprep.mubr.bf16.mxu0 0
        %724 = vmatmul.mubr.bf16.gmra.mxu0 %v470
        %v725 = vpop.f32.mrf.mxu0
        %v726 = vadd.f32 %v511, %v725
        %v727 = vpop.f32.mrf.mxu0
        %v728 = vadd.f32 %v515, %v727
        %v729 = vpop.f32.mrf.mxu0
        %v730 = vadd.f32 %v511, %v729
        %v731 = vpop.f32.mrf.mxu0
        %v732 = vadd.f32 %v515, %v731
        %733 = vmatprep.mubr.bf16.mxu0 0
        %734 = vmatmul.mubr.bf16.gmra.mxu0 %v471
        %v735 = vpop.f32.mrf.mxu0
        %v736 = vadd.f32 %v511, %v735
        %v737 = vpop.f32.mrf.mxu0
        %v738 = vadd.f32 %v515, %v737
        %v739 = vpop.f32.mrf.mxu0
        %v740 = vadd.f32 %v511, %v739
        %v741 = vpop.f32.mrf.mxu0
        %v742 = vadd.f32 %v515, %v741
        %743 = vmatprep.mubr.bf16.mxu0 0
        %744 = vmatmul.mubr.bf16.gmra.mxu0 %v472
        %v745 = vpop.f32.mrf.mxu0
        %v746 = vadd.f32 %v511, %v745
        %v747 = vpop.f32.mrf.mxu0
        %v748 = vadd.f32 %v515, %v747
        %v749 = vpop.f32.mrf.mxu0
        %v750 = vadd.f32 %v511, %v749
        %v751 = vpop.f32.mrf.mxu0
        %v752 = vadd.f32 %v515, %v751
        %753 = vmatprep.mubr.bf16.mxu0 0
        %754 = vmatmul.mubr.bf16.gmra.mxu0 %v473
        %v755 = vpop.f32.mrf.mxu0
        %v756 = vadd.f32 %v511, %v755
        %v757 = vpop.f32.mrf.mxu0
        %v758 = vadd.f32 %v515, %v757
        %v759 = vpop.f32.mrf.mxu0
        %v760 = vadd.f32 %v511, %v759
        %v761 = vpop.f32.mrf.mxu0
        %v762 = vadd.f32 %v515, %v761
        %763 = vdwg.mxu0
        %764 = vmatprep.subr.bf16.mxu0 0
        %765 = vmatpush1.bf16.msra.mxu0 %v626
        %766 = vmatprep.subr.bf16.mxu0 0
        %767 = vmatpush1.bf16.msra.mxu0 %v623
        %768 = vmatprep.subr.bf16.mxu0 0
        %769 = vmatpush1.bf16.msra.mxu0 %v620
        %770 = vmatprep.subr.bf16.mxu0 0
        %771 = vmatpush1.bf16.msra.mxu0 %v617
        %772 = vmatprep.subr.bf16.mxu0 0
        %773 = vmatpush1.bf16.msra.mxu0 %v614
        %774 = vmatprep.subr.bf16.mxu0 0
        %775 = vmatpush1.bf16.msra.mxu0 %v611
        %776 = vmatprep.subr.bf16.mxu0 0
        %777 = vmatpush1.bf16.msra.mxu0 %v608
        %778 = vmatprep.subr.bf16.mxu0 0
        %779 = vmatpush1.bf16.msra.mxu0 %v605
        %780 = vmatprep.subr.bf16.mxu0 0
        %781 = vmatpush2.bf16.msra.mxu0 0
        %782 = vmatprep.subr.bf16.mxu0 0
        %783 = vmatpush2.bf16.msra.mxu0 0
        %784 = vmatprep.subr.bf16.mxu0 0
        %785 = vmatpush2.bf16.msra.mxu0 0
        %786 = vmatprep.subr.bf16.mxu0 0
        %787 = vmatpush2.bf16.msra.mxu0 0
        %788 = vmatprep.subr.bf16.mxu0 0
        %789 = vmatpush2.bf16.msra.mxu0 0
        %790 = vmatprep.subr.bf16.mxu0 0
        %791 = vmatpush2.bf16.msra.mxu0 0
        %792 = vmatprep.subr.bf16.mxu0 0
        %793 = vmatpush2.bf16.msra.mxu0 0
        %794 = vmatprep.subr.bf16.mxu0 0
        %795 = vmatpush2.bf16.msra.mxu0 0
        %796 = vmatprep.mubr.bf16.mxu0 0
        %797 = vmatmul.mubr.bf16.gmra.mxu0 %v466
        %v798 = vpop.f32.mrf.mxu0
        %v799 = vadd.f32 %v519, %v798
        %v800 = vpop.f32.mrf.mxu0
        %v801 = vpop.f32.mrf.mxu0
        %v802 = vadd.f32 %v519, %v801
        %v803 = vpop.f32.mrf.mxu0
        %804 = vmatprep.mubr.bf16.mxu0 0
        %805 = vmatmul.mubr.bf16.gmra.mxu0 %v467
        %v806 = vpop.f32.mrf.mxu0
        %v807 = vadd.f32 %v519, %v806
        %v808 = vpop.f32.mrf.mxu0
        %v809 = vpop.f32.mrf.mxu0
        %v810 = vadd.f32 %v519, %v809
        %v811 = vpop.f32.mrf.mxu0
        %812 = vmatprep.mubr.bf16.mxu0 0
        %813 = vmatmul.mubr.bf16.gmra.mxu0 %v468
        %v814 = vpop.f32.mrf.mxu0
        %v815 = vadd.f32 %v519, %v814
        %v816 = vpop.f32.mrf.mxu0
        %v817 = vpop.f32.mrf.mxu0
        %v818 = vadd.f32 %v519, %v817
        %v819 = vpop.f32.mrf.mxu0
        %820 = vmatprep.mubr.bf16.mxu0 0
        %821 = vmatmul.mubr.bf16.gmra.mxu0 %v469
        %v822 = vpop.f32.mrf.mxu0
        %v823 = vadd.f32 %v519, %v822
        %v824 = vpop.f32.mrf.mxu0
        %v825 = vpop.f32.mrf.mxu0
        %v826 = vadd.f32 %v519, %v825
        %v827 = vpop.f32.mrf.mxu0
        %828 = vmatprep.mubr.bf16.mxu0 0
        %829 = vmatmul.mubr.bf16.gmra.mxu0 %v470
        %v830 = vpop.f32.mrf.mxu0
        %v831 = vadd.f32 %v519, %v830
        %v832 = vpop.f32.mrf.mxu0
        %v833 = vpop.f32.mrf.mxu0
        %v834 = vadd.f32 %v519, %v833
        %v835 = vpop.f32.mrf.mxu0
        %836 = vmatprep.mubr.bf16.mxu0 0
        %837 = vmatmul.mubr.bf16.gmra.mxu0 %v471
        %v838 = vpop.f32.mrf.mxu0
        %v839 = vadd.f32 %v519, %v838
        %v840 = vpop.f32.mrf.mxu0
        %v841 = vpop.f32.mrf.mxu0
        %v842 = vadd.f32 %v519, %v841
        %v843 = vpop.f32.mrf.mxu0
        %844 = vmatprep.mubr.bf16.mxu0 0
        %845 = vmatmul.mubr.bf16.gmra.mxu0 %v472
        %v846 = vpop.f32.mrf.mxu0
        %v847 = vadd.f32 %v519, %v846
        %v848 = vpop.f32.mrf.mxu0
        %v849 = vpop.f32.mrf.mxu0
        %v850 = vadd.f32 %v519, %v849
        %v851 = vpop.f32.mrf.mxu0
        %852 = vmatprep.mubr.bf16.mxu0 0
        %853 = vmatmul.mubr.bf16.gmra.mxu0 %v473
        %v854 = vpop.f32.mrf.mxu0
        %v855 = vadd.f32 %v519, %v854
        %v856 = vpop.f32.mrf.mxu0
        %v857 = vpop.f32.mrf.mxu0
        %v858 = vadd.f32 %v519, %v857
        %v859 = vpop.f32.mrf.mxu0
        %860 = vdwg.mxu0
        %v861 = vpack.c.bf16 %v690, %v686
        %v862 = vpack.c.bf16 %v700, %v696
        %v863 = vpack.c.bf16 %v710, %v706
        %v864 = vpack.c.bf16 %v720, %v716
        %v865 = vpack.c.bf16 %v730, %v726
        %v866 = vpack.c.bf16 %v740, %v736
        %v867 = vpack.c.bf16 %v750, %v746
        %v868 = vpack.c.bf16 %v760, %v756
        %v877 = vunpack.c.l.b16 %v861
        %v878 = vunpack.c.h.b16 %v861
        %v879 = vunpack.c.l.b16 %v862
        %v880 = vunpack.c.h.b16 %v862
        %v881 = vunpack.c.l.b16 %v863
        %v882 = vunpack.c.h.b16 %v863
        %v883 = vunpack.c.l.b16 %v864
        %v884 = vunpack.c.h.b16 %v864
        %v885 = vunpack.c.l.b16 %v865
        %v886 = vunpack.c.h.b16 %v865
        %v887 = vunpack.c.l.b16 %v866
        %v888 = vunpack.c.h.b16 %v866
        %v889 = vunpack.c.l.b16 %v867
        %v890 = vunpack.c.h.b16 %v867
        %v891 = vunpack.c.l.b16 %v868
        %v892 = vunpack.c.h.b16 %v868
        %v893 = vpack.c.b16 %v877, %v877
        %v894 = vpack.c.b16 %v878, %v878
        %v895 = vpack.c.b16 %v879, %v879
        %v896 = vpack.c.b16 %v880, %v880
        %v897 = vpack.c.b16 %v881, %v881
        %v898 = vpack.c.b16 %v882, %v882
        %v899 = vpack.c.b16 %v883, %v883
        %v900 = vpack.c.b16 %v884, %v884
        %v901 = vpack.c.b16 %v885, %v885
        %v902 = vpack.c.b16 %v886, %v886
        %v903 = vpack.c.b16 %v887, %v887
        %v904 = vpack.c.b16 %v888, %v888
        %v905 = vpack.c.b16 %v889, %v889
        %v906 = vpack.c.b16 %v890, %v890
        %v907 = vpack.c.b16 %v891, %v891
        %v908 = vpack.c.b16 %v892, %v892
        %925 = vst [vmem:[%s381] sm:$0xf] %v893
        %926 = vst [vmem:[%s381 + $0x4] sm:$0xf] %v894
        %927 = vst [vmem:[%s381 + $0x8] sm:$0xf] %v895
        %928 = vst [vmem:[%s381 + $0xc] sm:$0xf] %v896
        %929 = vst [vmem:[%s381 + $0x10] sm:$0xf] %v897
        %930 = vst [vmem:[%s381 + $0x14] sm:$0xf] %v898
        %931 = vst [vmem:[%s381 + $0x18] sm:$0xf] %v899
        %932 = vst [vmem:[%s381 + $0x1c] sm:$0xf] %v900
        %933 = vst [vmem:[%s381 + $0x20] sm:$0xf] %v901
        %934 = vst [vmem:[%s381 + $0x24] sm:$0xf] %v902
        %935 = vst [vmem:[%s381 + $0x28] sm:$0xf] %v903
        %936 = vst [vmem:[%s381 + $0x2c] sm:$0xf] %v904
        %937 = vst [vmem:[%s381 + $0x30] sm:$0xf] %v905
        %938 = vst [vmem:[%s381 + $0x34] sm:$0xf] %v906
        %939 = vst [vmem:[%s381 + $0x38] sm:$0xf] %v907
        %940 = vst [vmem:[%s381 + $0x3c] sm:$0xf] %v908
        %v941 = vpack.c.bf16 %v692, %v688
        %v942 = vpack.c.bf16 %v702, %v698
        %v943 = vpack.c.bf16 %v712, %v708
        %v944 = vpack.c.bf16 %v722, %v718
        %v945 = vpack.c.bf16 %v732, %v728
        %v946 = vpack.c.bf16 %v742, %v738
        %v947 = vpack.c.bf16 %v752, %v748
        %v948 = vpack.c.bf16 %v762, %v758
        %v957 = vunpack.c.l.b16 %v941
        %v958 = vunpack.c.h.b16 %v941
        %v959 = vunpack.c.l.b16 %v942
        %v960 = vunpack.c.h.b16 %v942
        %v961 = vunpack.c.l.b16 %v943
        %v962 = vunpack.c.h.b16 %v943
        %v963 = vunpack.c.l.b16 %v944
        %v964 = vunpack.c.h.b16 %v944
        %v965 = vunpack.c.l.b16 %v945
        %v966 = vunpack.c.h.b16 %v945
        %v967 = vunpack.c.l.b16 %v946
        %v968 = vunpack.c.h.b16 %v946
        %v969 = vunpack.c.l.b16 %v947
        %v970 = vunpack.c.h.b16 %v947
        %v971 = vunpack.c.l.b16 %v948
        %v972 = vunpack.c.h.b16 %v948
        %v973 = vpack.c.b16 %v957, %v957
        %v974 = vpack.c.b16 %v958, %v958
        %v975 = vpack.c.b16 %v959, %v959
        %v976 = vpack.c.b16 %v960, %v960
        %v977 = vpack.c.b16 %v961, %v961
        %v978 = vpack.c.b16 %v962, %v962
        %v979 = vpack.c.b16 %v963, %v963
        %v980 = vpack.c.b16 %v964, %v964
        %v981 = vpack.c.b16 %v965, %v965
        %v982 = vpack.c.b16 %v966, %v966
        %v983 = vpack.c.b16 %v967, %v967
        %v984 = vpack.c.b16 %v968, %v968
        %v985 = vpack.c.b16 %v969, %v969
        %v986 = vpack.c.b16 %v970, %v970
        %v987 = vpack.c.b16 %v971, %v971
        %v988 = vpack.c.b16 %v972, %v972
        %1005 = vst [vmem:[%s388] sm:$0xf] %v973
        %1006 = vst [vmem:[%s388 + $0x4] sm:$0xf] %v974
        %1007 = vst [vmem:[%s388 + $0x8] sm:$0xf] %v975
        %1008 = vst [vmem:[%s388 + $0xc] sm:$0xf] %v976
        %1009 = vst [vmem:[%s388 + $0x10] sm:$0xf] %v977
        %1010 = vst [vmem:[%s388 + $0x14] sm:$0xf] %v978
        %1011 = vst [vmem:[%s388 + $0x18] sm:$0xf] %v979
        %1012 = vst [vmem:[%s388 + $0x1c] sm:$0xf] %v980
        %1013 = vst [vmem:[%s388 + $0x20] sm:$0xf] %v981
        %1014 = vst [vmem:[%s388 + $0x24] sm:$0xf] %v982
        %1015 = vst [vmem:[%s388 + $0x28] sm:$0xf] %v983
        %1016 = vst [vmem:[%s388 + $0x2c] sm:$0xf] %v984
        %1017 = vst [vmem:[%s388 + $0x30] sm:$0xf] %v985
        %1018 = vst [vmem:[%s388 + $0x34] sm:$0xf] %v986
        %1019 = vst [vmem:[%s388 + $0x38] sm:$0xf] %v987
        %1020 = vst [vmem:[%s388 + $0x3c] sm:$0xf] %v988
        %v1021 = vpack.c.bf16 %v802, %v799
        %v1022 = vpack.c.bf16 %v810, %v807
        %v1023 = vpack.c.bf16 %v818, %v815
        %v1024 = vpack.c.bf16 %v826, %v823
        %v1025 = vpack.c.bf16 %v834, %v831
        %v1026 = vpack.c.bf16 %v842, %v839
        %v1027 = vpack.c.bf16 %v850, %v847
        %v1028 = vpack.c.bf16 %v858, %v855
        %v1037 = vunpack.c.l.b16 %v1021
        %v1038 = vunpack.c.h.b16 %v1021
        %v1039 = vunpack.c.l.b16 %v1022
        %v1040 = vunpack.c.h.b16 %v1022
        %v1041 = vunpack.c.l.b16 %v1023
        %v1042 = vunpack.c.h.b16 %v1023
        %v1043 = vunpack.c.l.b16 %v1024
        %v1044 = vunpack.c.h.b16 %v1024
        %v1045 = vunpack.c.l.b16 %v1025
        %v1046 = vunpack.c.h.b16 %v1025
        %v1047 = vunpack.c.l.b16 %v1026
        %v1048 = vunpack.c.h.b16 %v1026
        %v1049 = vunpack.c.l.b16 %v1027
        %v1050 = vunpack.c.h.b16 %v1027
        %v1051 = vunpack.c.l.b16 %v1028
        %v1052 = vunpack.c.h.b16 %v1028
        %v1053 = vpack.c.b16 %v1037, %v1037
        %v1054 = vpack.c.b16 %v1038, %v1038
        %v1055 = vpack.c.b16 %v1039, %v1039
        %v1056 = vpack.c.b16 %v1040, %v1040
        %v1057 = vpack.c.b16 %v1041, %v1041
        %v1058 = vpack.c.b16 %v1042, %v1042
        %v1059 = vpack.c.b16 %v1043, %v1043
        %v1060 = vpack.c.b16 %v1044, %v1044
        %v1061 = vpack.c.b16 %v1045, %v1045
        %v1062 = vpack.c.b16 %v1046, %v1046
        %v1063 = vpack.c.b16 %v1047, %v1047
        %v1064 = vpack.c.b16 %v1048, %v1048
        %v1065 = vpack.c.b16 %v1049, %v1049
        %v1066 = vpack.c.b16 %v1050, %v1050
        %v1067 = vpack.c.b16 %v1051, %v1051
        %v1068 = vpack.c.b16 %v1052, %v1052
        %1085 = vst [vmem:[%s395] sm:$0xf] %v1053
        %1086 = vst [vmem:[%s395 + $0x4] sm:$0xf] %v1054
        %1087 = vst [vmem:[%s395 + $0x8] sm:$0xf] %v1055
        %1088 = vst [vmem:[%s395 + $0xc] sm:$0xf] %v1056
        %1089 = vst [vmem:[%s395 + $0x10] sm:$0xf] %v1057
        %1090 = vst [vmem:[%s395 + $0x14] sm:$0xf] %v1058
        %1091 = vst [vmem:[%s395 + $0x18] sm:$0xf] %v1059
        %1092 = vst [vmem:[%s395 + $0x1c] sm:$0xf] %v1060
        %1093 = vst [vmem:[%s395 + $0x20] sm:$0xf] %v1061
        %1094 = vst [vmem:[%s395 + $0x24] sm:$0xf] %v1062
        %1095 = vst [vmem:[%s395 + $0x28] sm:$0xf] %v1063
        %1096 = vst [vmem:[%s395 + $0x2c] sm:$0xf] %v1064
        %1097 = vst [vmem:[%s395 + $0x30] sm:$0xf] %v1065
        %1098 = vst [vmem:[%s395 + $0x34] sm:$0xf] %v1066
        %1099 = vst [vmem:[%s395 + $0x38] sm:$0xf] %v1067
        %1100 = vst [vmem:[%s395 + $0x3c] sm:$0xf] %v1068
        %s1101 = sand.u32 %s175, 1
        %s1102 = scalar_lea.sflag [#allocation4], %s1101
        %s1103 = sand.u32 %s175, 1
        %s1104 = smul.addr %s1103, 64
        %s1105 = scalar_lea.vmem [#allocation8], %s1104
        %s1106 = sand.u32 %s31, 1
        %s1107 = scalar_lea.sflag [#allocation10], %s1106
        %s1108 = sand.u32 %s203, 1
        %s1109 = smul.addr %s1108, 64
        %s1110 = scalar_lea.vmem [#allocation9], %s1109
        %s1111 = sand.u32 %s31, 1
        %s1112 = scalar_lea.sflag [#allocation10], %s1111
        %s1113 = sand.u32 %s231, 1
        %s1114 = smul.addr %s1113, 64
        %s1115 = scalar_lea.vmem [#allocation11], %s1114
        // Predicated region
        $region53: #{tpu_custom_call.1} parent=39 // pred_check
          %p1116 = pneg %p185
        $region54: #{tpu_custom_call.1} parent=39 // pred_check_branch
          %1118 = sbr.rel (%p1116) target = $region56
        $region55: #{tpu_custom_call.1} parent=39 // pred_region
          %s1119 = smul.u32 16, %s36
          %s1121 = ssub.s32 1024, 1024
          %1122 = vsyncadd %s1102, %s1121
          %s1123 = smul.addr %s35, 32
          %s1124 = sadd.s32 %s1119, %s1123
          %s1125 = smul.addr %s1124, 64
          %s1126 = scalar_lea.hbm %s5, %s1125
          %s1127 = sshll.u32 %s1105, 4
          %s1128 = int_to_ptr.vmem [resolvable:$true] %s1127
          %1133 = dma.vmem_to_hbm [thread:$0]  %s1128, 1024, %s1126, %s1102, 64, 64, 4
        $region56: #{tpu_custom_call.1} parent=39 // pred_fallthru
          _
        // Predicated region
        $region57: #{tpu_custom_call.1} parent=39 // pred_check
          %p1134 = pneg %p213
        $region58: #{tpu_custom_call.1} parent=39 // pred_check_branch
          %1136 = sbr.rel (%p1134) target = $region60
        $region59: #{tpu_custom_call.1} parent=39 // pred_region
          %s1137 = smul.u32 16, %s36
          %s1139 = ssub.s32 1024, 1024
          %1140 = vsyncadd %s1107, %s1139
          %s1141 = smul.addr %s35, 32
          %s1142 = sadd.s32 %s1137, %s1141
          %s1143 = smul.addr %s1142, 64
          %s1144 = scalar_lea.hbm %s6, %s1143
          %s1145 = sshll.u32 %s1110, 4
          %s1146 = int_to_ptr.vmem [resolvable:$true] %s1145
          %1151 = dma.vmem_to_hbm [thread:$0]  %s1146, 1024, %s1144, %s1107, 64, 64, 4
        $region60: #{tpu_custom_call.1} parent=39 // pred_fallthru
          _
        // Predicated region
        $region61: #{tpu_custom_call.1} parent=39 // pred_check
          %p1152 = pneg %p241
        $region62: #{tpu_custom_call.1} parent=39 // pred_check_branch
          %1154 = sbr.rel (%p1152) target = $region64
        $region63: #{tpu_custom_call.1} parent=39 // pred_region
          %s1155 = smul.u32 16, %s36
          %s1157 = ssub.s32 1024, 1024
          %1158 = vsyncadd %s1112, %s1157
          %s1159 = smul.addr %s35, 32
          %s1160 = sadd.s32 %s1155, %s1159
          %s1161 = smul.addr %s1160, 64
          %s1162 = scalar_lea.hbm %s7, %s1161
          %s1163 = sshll.u32 %s1115, 4
          %s1164 = int_to_ptr.vmem [resolvable:$true] %s1163
          %1169 = dma.vmem_to_hbm [thread:$0]  %s1164, 1024, %s1162, %s1112, 64, 64, 4
        $region64: #{tpu_custom_call.1} parent=39 // pred_fallthru
          _
      $region40: #{tpu_custom_call.1} parent=5 // pred_fallthru
        _
      %p1170 = scmp.le.s32.totalorder 2, %s26
      // Predicated region
      $region65: #{tpu_custom_call.1} parent=5 // pred_check
        %p1171 = pneg %p1170
      $region66: #{tpu_custom_call.1} parent=5 // pred_check_branch
        %1173 = sbr.rel (%p1171) target = $region68
      $region67: #{tpu_custom_call.1} parent=5 // pred_region
        %s1174 = ssub.s32 %s26, 2
        // Predicated region
        $region69: #{tpu_custom_call.1} parent=67 // pred_check
          %p1175 = pneg %p191
        $region70: #{tpu_custom_call.1} parent=67 // pred_check_branch
          %1177 = sbr.rel (%p1175) target = $region72
        $region71: #{tpu_custom_call.1} parent=67 // pred_region
          %s1178 = sand.u32 %s176, 1
          %s1179 = scalar_lea.sflag [#allocation4], %s1178
          %s1180 = sand.u32 %s176, 1
          %s1181 = smul.addr %s1180, 64
          %s1182 = scalar_lea.vmem [#allocation8], %s1181
          %1183 = dma.done %s1179, 1024
        $region72: #{tpu_custom_call.1} parent=67 // pred_fallthru
          _
        // Predicated region
        $region73: #{tpu_custom_call.1} parent=67 // pred_check
          %p1184 = pneg %p219
        $region74: #{tpu_custom_call.1} parent=67 // pred_check_branch
          %1186 = sbr.rel (%p1184) target = $region76
        $region75: #{tpu_custom_call.1} parent=67 // pred_region
          %s1187 = sand.u32 %s32, 1
          %s1188 = scalar_lea.sflag [#allocation10], %s1187
          %s1189 = sand.u32 %s204, 1
          %s1190 = smul.addr %s1189, 64
          %s1191 = scalar_lea.vmem [#allocation9], %s1190
          %1192 = dma.done %s1188, 1024
        $region76: #{tpu_custom_call.1} parent=67 // pred_fallthru
          _
        // Predicated region
        $region77: #{tpu_custom_call.1} parent=67 // pred_check
          %p1193 = pneg %p247
        $region78: #{tpu_custom_call.1} parent=67 // pred_check_branch
          %1195 = sbr.rel (%p1193) target = $region80
        $region79: #{tpu_custom_call.1} parent=67 // pred_region
          %s1196 = sand.u32 %s32, 1
          %s1197 = scalar_lea.sflag [#allocation10], %s1196
          %s1198 = sand.u32 %s232, 1
          %s1199 = smul.addr %s1198, 64
          %s1200 = scalar_lea.vmem [#allocation11], %s1199
          %1201 = dma.done %s1197, 1024
        $region80: #{tpu_custom_call.1} parent=67 // pred_fallthru
          _
      $region68: #{tpu_custom_call.1} parent=5 // pred_fallthru
        _
    $region6: #{tpu_custom_call.1} parent=1 // loop_footer
      %s30 = sadd.s32 1, %s26
    $region7: #{tpu_custom_call.1} parent=1 // loop_footer_branch
      %25 = sbr.rel target = $region3
    $region8: #{tpu_custom_call.1} parent=1 // loop_exit
      _
    %1202 = vsyncpa [#allocation3], 1
    %s1203 = scalar_lea.sflag [#allocation3], 1
    %1204 = vsyncpa %s1203, 1
    %1205 = vsyncpa [#allocation6], 1
    %s1206 = scalar_lea.sflag [#allocation6], 1
    %1207 = vsyncpa %s1206, 1
    %1208 = vsyncpa [#allocation4], 1
    %s1209 = scalar_lea.sflag [#allocation4], 1
    %1210 = vsyncpa %s1209, 1
    %1211 = vsyncpa [#allocation10], 1
    %s1212 = scalar_lea.sflag [#allocation10], 1
    %1213 = vsyncpa %s1212, 1

</llo_original>
